<compile_context>
chip_gen: v6e
topology: v6e:2x2x1
jax: 0.10.0
libtpu: 0.0.40
codegen_flags: <defaults>
</compile_context>

<pallas_src>
import functools

import jax
import jax.numpy as jnp
from jax.experimental import pallas as pl
from jax.experimental.pallas import tpu as pltpu


# ----------------------------- Pallas kernel --------------------------------

def _linear_kernel(x_ref, w_ref, b_ref, o_ref):
    # x_ref : (TM, H)   bf16 activation tile
    # w_ref : (H, TV)   bf16 weight tile
    # b_ref : (1, TV)   fp32 bias tile (broadcast over rows)
    # o_ref : (TM, TV)  fp32 output tile
    acc = jnp.dot(x_ref[...], w_ref[...], preferred_element_type=jnp.float32)
    o_ref[...] = (acc + b_ref[...]).astype(o_ref.dtype)


_TM_TARGET = 512    # row tile: multiple of 8/256, safe for v5e/v6e/v7x VMEM
_TV_TARGET = 1024   # vocab tile: multiple of 128 (lane-dense, unmasked vst)


def _pick_tile(dim, target, align):
    """Largest aligned tile <= target; fall back to the full dim if it's small."""
    if dim <= target:
        return dim                    # block == full dim is always legal
    return max(align, (target // align) * align)


@functools.partial(jax.jit, static_argnames=("out_dtype",))
def linear_pallas(x2d, w, b, *, out_dtype=jnp.float32):
    """Fused y = x @ w + b on TPU via Pallas.

    x2d: (M, H) bf16/fp32 activations, w: (H, V) bf16 weight, b: (V,) fp32 bias.
    Returns (M, V) in `out_dtype` (fp32 accumulation on the MXU).
    """
    M, H = x2d.shape
    _, V = w.shape
    b2d = b.reshape(1, V).astype(jnp.float32)
    x2d = x2d.astype(jnp.bfloat16)
    w = w.astype(jnp.bfloat16)

    TM = _pick_tile(M, _TM_TARGET, 8)
    TV = _pick_tile(V, _TV_TARGET, 128)
    grid = (pl.cdiv(M, TM), pl.cdiv(V, TV))

    # VMEM budget: double-buffered x/w/bias/out tiles plus headroom, capped so a
    # v7x-sized (64 MiB physical) chip is never over-asked.
    per_step = TM * H * 2 + H * TV * 2 + TV * 4 + TM * TV * 4
    vmem_budget = int(min(96 * 2**20, max(32 * 2**20, 4 * per_step)))

    return pl.pallas_call(
        _linear_kernel,
        out_shape=jax.ShapeDtypeStruct((M, V), out_dtype),
        grid=grid,
        in_specs=[
            pl.BlockSpec((TM, H), lambda i, j: (i, 0)),
            pl.BlockSpec((H, TV), lambda i, j: (0, j)),
            pl.BlockSpec((1, TV), lambda i, j: (0, j)),
        ],
        out_specs=pl.BlockSpec((TM, TV), lambda i, j: (i, j)),
        compiler_params=pltpu.CompilerParams(
            dimension_semantics=("parallel", "parallel"),
            vmem_limit_bytes=vmem_budget),
    )(x2d, w, b2d)


# --------------------------- Module equivalent -------------------------------

class PredictionLayer:
    """nn.Linear(hidden, vocab) equivalent, executed with the Pallas kernel."""

    def __init__(self, hidden, vocab, key):
        kw, kb = jax.random.split(key)
        bound = 1.0 / (hidden ** 0.5)
        # Deterministic init mirroring nn.Linear's uniform(-1/sqrt(H), 1/sqrt(H)).
        w_f32 = jax.random.uniform(kw, (hidden, vocab), jnp.float32, -bound, bound)
        self.w = w_f32.astype(jnp.bfloat16)     # bf16 weight: half the HBM bytes
        self.b = jax.random.uniform(kb, (vocab,), jnp.float32, -bound, bound)

    def __call__(self, x):
        B, S, H = x.shape
        y = linear_pallas(x.reshape(B * S, H), self.w, self.b)
        return y.reshape(B, S, -1)


class TransformerPredictor:
    """Pallas/JAX port of network.prediction.transformer.TransformerPredictor."""

    def __init__(self, prediction_layer):
        self.prediction_layer = prediction_layer

    def forward(self, x, **kwargs):
        ltr_input, rtl_input = x
        if rtl_input is None:
            # TODO(synk): original code calls prediction_layer(x) on the whole
            # tuple here (likely an upstream bug); we apply it to the ltr stream.
            ltr = self.prediction_layer(ltr_input)
            return (ltr, None)
        # Fuse both streams into one pallas_call so the (H, V) weight is streamed
        # from HBM once: concatenate along the batch(row) axis, then split.
        B = ltr_input.shape[0]
        fused = jnp.concatenate([ltr_input, rtl_input], axis=0)
        out = self.prediction_layer(fused)
        return (out[:B], out[B:])

    __call__ = forward


# --------------------------------- main --------------------------------------

if __name__ == "__main__":
    key = jax.random.PRNGKey(0)
    k_params, k_ltr, k_rtl = jax.random.split(key, 3)

    batch, seq, hidden, vocab = 2, 8, 32, 128

    prediction_layer = PredictionLayer(hidden, vocab, k_params)
    model = TransformerPredictor(prediction_layer)

    ltr_input = jax.random.normal(k_ltr, (batch, seq, hidden), jnp.float32)
    rtl_input = jax.random.normal(k_rtl, (batch, seq, hidden), jnp.float32)

    # Bidirectional path (single fused kernel launch for both streams).
    ltr_out, rtl_out = model((ltr_input, rtl_input))
    jax.block_until_ready(ltr_out)
    jax.block_until_ready(rtl_out)

    # Unidirectional path (rtl is None).
    ltr_only, none_out = model((ltr_input, None))
    jax.block_until_ready(ltr_only)

    # Correctness check against a plain JAX bf16-MXU reference (fp32 accumulate).
    def ref_proj(x):
        xb = x.reshape(-1, hidden).astype(jnp.bfloat16)
        return jnp.dot(xb, prediction_layer.w,
                       preferred_element_type=jnp.float32) + prediction_layer.b

    ref_ltr = ref_proj(ltr_input)
    ref_rtl = ref_proj(rtl_input)
    assert jnp.allclose(ltr_out.reshape(-1, vocab), ref_ltr, atol=1e-3, rtol=1e-3)
    assert jnp.allclose(rtl_out.reshape(-1, vocab), ref_rtl, atol=1e-3, rtol=1e-3)
    assert jnp.allclose(ltr_only.reshape(-1, vocab), ref_ltr, atol=1e-3, rtol=1e-3)
    assert none_out is None
    assert ltr_out.shape == (batch, seq, vocab)
    assert rtl_out.shape == (batch, seq, vocab)

    print("KERNEL_OK")
</pallas_src>

<mosaic_0001>
module attributes {stable_mosaic.version = 11 : i64} {
  func.func @_linear_kernel(%arg0: i32, %arg1: i32, %arg2: memref<32x32xbf16, #tpu.memory_space<vmem>>, %arg3: memref<32x128xbf16, #tpu.memory_space<vmem>>, %arg4: memref<1x128xf32, #tpu.memory_space<vmem>>, %arg5: memref<32x128xf32, #tpu.memory_space<vmem>>) attributes {dimension_semantics = [#tpu.dimension_semantics<parallel>, #tpu.dimension_semantics<parallel>], iteration_bounds = array<i64: 1, 1>, scalar_prefetch = 0 : i64, scratch_operands = 0 : i64, tpu.core_type = #tpu.core_type<tc>, window_params = [{transform_indices = @transform_0, window_bounds = array<i64: 32, 32>}, {transform_indices = @transform_1, window_bounds = array<i64: 32, 128>}, {transform_indices = @transform_2, window_bounds = array<i64: 1, 128>}, {transform_indices = @transform_3, window_bounds = array<i64: 32, 128>}]} {
    %c0 = arith.constant 0 : index
    %c0_0 = arith.constant 0 : index
    %0 = vector.load %arg2[%c0, %c0_0] : memref<32x32xbf16, #tpu.memory_space<vmem>>, vector<32x32xbf16>
    %c0_1 = arith.constant 0 : index
    %c0_2 = arith.constant 0 : index
    %1 = vector.load %arg3[%c0_1, %c0_2] : memref<32x128xbf16, #tpu.memory_space<vmem>>, vector<32x128xbf16>
    %cst = arith.constant dense<0.000000e+00> : vector<32x128xf32>
    %2 = tpu.matmul %0, %1, %cst {dimension_numbers = #tpu.dot_dimension_numbers<[1], [0], [0], [1], [0, 0, 1, 1], [], []>} : vector<32x32xbf16>, vector<32x128xbf16>, vector<32x128xf32> -> vector<32x128xf32>
    %c0_3 = arith.constant 0 : index
    %c0_4 = arith.constant 0 : index
    %3 = vector.load %arg4[%c0_3, %c0_4] : memref<1x128xf32, #tpu.memory_space<vmem>>, vector<1x128xf32>
    %4 = vector.broadcast %3 : vector<1x128xf32> to vector<32x128xf32>
    %5 = arith.addf %2, %4 : vector<32x128xf32>
    %c0_5 = arith.constant 0 : index
    %c0_6 = arith.constant 0 : index
    %6 = vector.load %arg5[%c0_5, %c0_6] : memref<32x128xf32, #tpu.memory_space<vmem>>, vector<32x128xf32>
    tpu.vector_store %arg5[%c0_5, %c0_6], %5 {strides = array<i32>} : memref<32x128xf32, #tpu.memory_space<vmem>>, vector<32x128xf32>,
    return
  }
  func.func @transform_0(%arg0: i32, %arg1: i32) -> (i32, i32) {
    %c0_i32 = arith.constant 0 : i32
    %c0_i32_0 = arith.constant 0 : i32
    return %arg0, %c0_i32 : i32, i32
  }
  func.func @transform_1(%arg0: i32, %arg1: i32) -> (i32, i32) {
    %c0_i32 = arith.constant 0 : i32
    %c0_i32_0 = arith.constant 0 : i32
    return %c0_i32, %arg1 : i32, i32
  }
  func.func @transform_2(%arg0: i32, %arg1: i32) -> (i32, i32) {
    %c0_i32 = arith.constant 0 : i32
    %c0_i32_0 = arith.constant 0 : i32
    return %c0_i32, %arg1 : i32, i32
  }
  func.func @transform_3(%arg0: i32, %arg1: i32) -> (i32, i32) {
    %c0_i32 = arith.constant 0 : i32
    return %arg0, %arg1 : i32, i32
  }
}

</mosaic_0001>

<llo_original>
// kernel: linear_pallas.1
$region0: #{linear_pallas.1}
  #allocation0 [shape = 'u32[]', space=smem, size = 0x4, offset = 0x4, fixed_abs, tag = 'smem constant byte address 0x4 - core index']
  #allocation1 [shape = 'u32[144,128]{1,0:T(1,128)}', space=vmem, size = 0x12000, scoped, tag = 'internal scratch']
  %s0 = inlined_call_operand.vmem [shape: bf16[32,32], index: 0, kind: input, shape index: {}]
  %s1 = inlined_call_operand.vmem [shape: bf16[32,128], index: 1, kind: input, shape index: {}]
  %s2 = inlined_call_operand.vmem [shape: f32[1,128], index: 2, kind: input, shape index: {}]
  %s3 = inlined_call_operand.hbm [shape: f32[32,128], index: 3, kind: output, shape index: {}]
  %s4 = sld [smem:[#allocation0]]
  $region22: #{linear_pallas.1} parent=0
    _
  %s6 = ssub.s32 1, %s4
  %s7 = scalar_select 0, %s6, %s4
  $region1: #{linear_pallas.1} parent=0
    #allocation2 [shape = 'u8[16384]{0}', space=vmem, size = 0x4000, scoped, tag = 'output window, operand 0, single buffered']
    #allocation3 [shape = 's32[1]{0}', space=sflag, size = 0x4, scoped, tag = 'scoped memory for linear_pallas.1']
    %8 = vsyncpa [#allocation3], 0
    // Predicated region
    $region2: #{linear_pallas.1} parent=1 // pred_check
      _
    $region3: #{linear_pallas.1} parent=1 // pred_check_branch
      %10 = sbr.rel (0) target = $region5
    $region4: #{linear_pallas.1} parent=1 // pred_region
      _
    $region5: #{linear_pallas.1} parent=1 // pred_fallthru
      _
    // Predicated region
    $region6: #{linear_pallas.1} parent=1 // pred_check
      _
    $region7: #{linear_pallas.1} parent=1 // pred_check_branch
      %12 = sbr.rel (0) target = $region9
    $region8: #{linear_pallas.1} parent=1 // pred_region
      _
    $region9: #{linear_pallas.1} parent=1 // pred_fallthru
      _
    // Predicated region
    $region10: #{linear_pallas.1} parent=1 // pred_check
      _
    $region11: #{linear_pallas.1} parent=1 // pred_check_branch
      %14 = sbr.rel (0) target = $region13
    $region12: #{linear_pallas.1} parent=1 // pred_region
      _
    $region13: #{linear_pallas.1} parent=1 // pred_fallthru
      _
    %v16 = vld [vmem:[%s0] sm:$0xf]
    %v17 = vld [vmem:[%s0 + $0x4] sm:$0xf]
    %v18 = vld [vmem:[%s0 + $0x8] sm:$0xf]
    %v19 = vld [vmem:[%s0 + $0xc] sm:$0xf]
    %v20 = vld [vmem:[%s1] sm:$0xf]
    %v21 = vld [vmem:[%s1 + $0x4] sm:$0xf]
    %v22 = vld [vmem:[%s1 + $0x8] sm:$0xf]
    %v23 = vld [vmem:[%s1 + $0xc] sm:$0xf]
    %v24 = vld [vmem:[%s2] sm:$0x1]
    %v26 = vlaneseq
    %v27 = vshrl.u32 %v26, 7
    %v28 = vsub.s32 0, %v27
    %v29 = vrot.slane %v24, %v28
    %v35 = vunpack.c.l.b16 %v16
    %v36 = vunpack.c.l.b16 %v17
    %v37 = vunpack.c.l.b16 %v18
    %v38 = vunpack.c.l.b16 %v19
    %v39 = vpack.c.b16 %v36, %v35
    %v40 = vpack.c.b16 %v38, %v37
    %v45 = vunpack.c.l.b16 %v20
    %v46 = vunpack.c.l.b16 %v21
    %v47 = vunpack.c.l.b16 %v22
    %v48 = vunpack.c.l.b16 %v23
    %v49 = vpack.c.b16 %v46, %v45
    %v50 = vpack.c.b16 %v48, %v47
    %vm53 = vcmask 261120
    %v55 = vsel %vm53, %v39, 0
    %v58 = vsel %vm53, %v40, 0
    %60 = vmatprep.subr.bf16.mxu0 0
    %61 = vmatpush1.bf16.msra.mxu0 0
    %62 = vmatprep.subr.bf16.mxu0 0
    %63 = vmatpush1.bf16.msra.mxu0 0
    %64 = vmatprep.subr.bf16.mxu0 0
    %65 = vmatpush1.bf16.msra.mxu0 0
    %66 = vmatprep.subr.bf16.mxu0 0
    %67 = vmatpush1.bf16.msra.mxu0 0
    %68 = vmatprep.subr.bf16.mxu0 0
    %69 = vmatpush1.bf16.msra.mxu0 0
    %70 = vmatprep.subr.bf16.mxu0 0
    %71 = vmatpush1.bf16.msra.mxu0 0
    %72 = vmatprep.subr.bf16.mxu0 0
    %73 = vmatpush1.bf16.msra.mxu0 %v50
    %74 = vmatprep.subr.bf16.mxu0 0
    %75 = vmatpush1.bf16.msra.mxu0 %v49
    %76 = vmatprep.subr.bf16.mxu0 0
    %77 = vmatpush2.bf16.msra.mxu0 0
    %78 = vmatprep.subr.bf16.mxu0 0
    %79 = vmatpush2.bf16.msra.mxu0 0
    %80 = vmatprep.subr.bf16.mxu0 0
    %81 = vmatpush2.bf16.msra.mxu0 0
    %82 = vmatprep.subr.bf16.mxu0 0
    %83 = vmatpush2.bf16.msra.mxu0 0
    %84 = vmatprep.subr.bf16.mxu0 0
    %85 = vmatpush2.bf16.msra.mxu0 0
    %86 = vmatprep.subr.bf16.mxu0 0
    %87 = vmatpush2.bf16.msra.mxu0 0
    %88 = vmatprep.subr.bf16.mxu0 0
    %89 = vmatpush2.bf16.msra.mxu0 0
    %90 = vmatprep.subr.bf16.mxu0 0
    %91 = vmatpush2.bf16.msra.mxu0 0
    %92 = vmatprep.mubr.bf16.mxu0 0
    %93 = vmatmul.mubr.bf16.gmra.mxu0 %v55
    %v94 = vpop.f32.mrf.mxu0
    %v95 = vadd.f32 %v29, %v94
    %v96 = vpop.f32.mrf.mxu0
    %v97 = vpop.f32.mrf.mxu0
    %v98 = vadd.f32 %v29, %v97
    %v99 = vpop.f32.mrf.mxu0
    %100 = vmatprep.mubr.bf16.mxu0 0
    %101 = vmatmul.mubr.bf16.gmra.mxu0 %v58
    %v102 = vpop.f32.mrf.mxu0
    %v103 = vadd.f32 %v29, %v102
    %v104 = vpop.f32.mrf.mxu0
    %v105 = vpop.f32.mrf.mxu0
    %v106 = vadd.f32 %v29, %v105
    %v107 = vpop.f32.mrf.mxu0
    %108 = vdwg.mxu0
    %109 = vst [vmem:[#allocation2] sm:$0xff] %v95
    %110 = vst [vmem:[#allocation2 + $0x8] sm:$0xff] %v98
    %111 = vst [vmem:[#allocation2 + $0x10] sm:$0xff] %v103
    %112 = vst [vmem:[#allocation2 + $0x18] sm:$0xff] %v106
    // Predicated region
    $region14: #{linear_pallas.1} parent=1 // pred_check
      _
    $region15: #{linear_pallas.1} parent=1 // pred_check_branch
      %114 = sbr.rel (0) target = $region17
    $region16: #{linear_pallas.1} parent=1 // pred_region
      %s116 = ssub.s32 512, 512
      %117 = vsyncadd [#allocation3], %s116
      %s118 = sshll.u32 [#allocation2], 4
      %s119 = int_to_ptr.vmem [resolvable:$true] %s118
      %124 = dma.vmem_to_hbm [thread:$0]  %s119, 512, %s3, [#allocation3], 128, 128, 8
    $region17: #{linear_pallas.1} parent=1 // pred_fallthru
      _
    // Predicated region
    $region18: #{linear_pallas.1} parent=1 // pred_check
      _
    $region19: #{linear_pallas.1} parent=1 // pred_check_branch
      %126 = sbr.rel (0) target = $region21
    $region20: #{linear_pallas.1} parent=1 // pred_region
      %127 = dma.done [#allocation3], 512
    $region21: #{linear_pallas.1} parent=1 // pred_fallthru
      _
    %128 = vsyncpa [#allocation3], 1

</llo_original>
